<compile_context>
chip_gen: v6e
topology: v6e:2x2x1
jax: 0.10.0
libtpu: 0.0.40
codegen_flags: <defaults>
</compile_context>

<pallas_src>
import math

import jax
import jax.numpy as jnp
from jax.experimental import pallas as pl
from jax.experimental.pallas import tpu as pltpu

_LOG2 = math.log(2.0)
_SOFTPLUS_THRESHOLD = 20.0  # matches torch.nn.Softplus default

_LANES = 1024                            # multiple of 128 -> unmasked lane-dense stores
_TARGET_BLOCK_BYTES = 8 * 1024 * 1024    # 8 MiB per streamed block (all generations)
_SMALL_CUTOFF_BYTES = 8 * 1024 * 1024    # no-grid fast path for inputs up to 8 MiB
_VMEM_LIMIT_BYTES = 48 * 1024 * 1024     # 2in+2out x 8 MiB = 32 MiB + headroom, < 64 MiB (v7x)


def _softplus2_kernel(x_ref, o_ref):
    x = x_ref[...]
    # f32 compute: required on v5e (no bf16 VPU/EUP); kernel is mem-bound so
    # the upcast is free on v6e/v7x.
    xf = x.astype(jnp.float32)
    # Numerically stable softplus: max(x,0) + log1p(exp(-|x|)) never overflows.
    sp = jnp.maximum(xf, 0.0) + jnp.log1p(jnp.exp(-jnp.abs(xf)))
    # Match torch.nn.Softplus exactly: linear above the threshold.
    sp = jnp.where(xf > _SOFTPLUS_THRESHOLD, xf, sp)
    o_ref[...] = (sp - _LOG2).astype(o_ref.dtype)


def softplus2(x: jax.Array, *,
              target_block_bytes: int = _TARGET_BLOCK_BYTES,
              lanes: int = _LANES) -> jax.Array:
    """SoftPlus2 activation: log(exp(x)+1) - log(2). Elementwise, any shape."""
    orig_shape = x.shape
    orig_dtype = x.dtype
    total = x.size
    if total == 0:
        return x

    itemsize = x.dtype.itemsize
    total_bytes = total * itemsize
    x_flat = jnp.ravel(x)

    # ---------- small-input fast path: one whole-array block, no grid ----------
    if total_bytes <= _SMALL_CUTOFF_BYTES:
        pad_lanes = 128
        padded = pl.cdiv(total, pad_lanes) * pad_lanes
        if padded != total:
            x_flat = jnp.pad(x_flat, (0, padded - total))
        rows = padded // pad_lanes
        x2d = x_flat.reshape(rows, pad_lanes)
        out2d = pl.pallas_call(
            _softplus2_kernel,
            out_shape=jax.ShapeDtypeStruct((rows, pad_lanes), orig_dtype),
            compiler_params=pltpu.CompilerParams(
                vmem_limit_bytes=_VMEM_LIMIT_BYTES,
            ),
        )(x2d)
        out_flat = out2d.reshape(-1)
        if padded != total:
            out_flat = out_flat[:total]
        return out_flat.reshape(orig_shape)

    # ---------- large-input path: byte-sized blocks, masked ragged last block ----------
    # Size the block in bytes so per-step DMA time is dtype-independent; keep
    # block_rows a multiple of 32 so (8,128)/(16,128)/(32,128) tiling all hold.
    block_rows = max(32, (target_block_bytes // (lanes * itemsize)) // 32 * 32)

    padded = pl.cdiv(total, lanes) * lanes  # pad only to a lane multiple (often a no-op)
    if padded != total:
        x_flat = jnp.pad(x_flat, (0, padded - total))
    rows = padded // lanes
    x2d = x_flat.reshape(rows, lanes)

    grid = (pl.cdiv(rows, block_rows),)  # Pallas masks the partial last block
    out2d = pl.pallas_call(
        _softplus2_kernel,
        out_shape=jax.ShapeDtypeStruct((rows, lanes), orig_dtype),
        grid=grid,
        in_specs=[pl.BlockSpec((block_rows, lanes), lambda i: (i, 0))],
        out_specs=pl.BlockSpec((block_rows, lanes), lambda i: (i, 0)),
        compiler_params=pltpu.CompilerParams(
            dimension_semantics=("parallel",),
            vmem_limit_bytes=_VMEM_LIMIT_BYTES,
        ),
    )(x2d)
    out_flat = out2d.reshape(-1)
    if padded != total:
        out_flat = out_flat[:total]
    return out_flat.reshape(orig_shape)


def _ref_softplus2(x):
    xf = x.astype(jnp.float32)
    sp = jnp.where(xf > _SOFTPLUS_THRESHOLD, xf, jnp.log1p(jnp.exp(xf)))
    return (sp - _LOG2).astype(x.dtype)


if __name__ == "__main__":
    key = jax.random.PRNGKey(0)

    # NCHW input matching the module's typical use: (2, 4, 16, 16)
    x = jax.random.normal(key, (2, 4, 16, 16), dtype=jnp.float32) * 5.0
    out = softplus2(x)
    jax.block_until_ready(out)

    ref = _ref_softplus2(x)
    assert out.shape == x.shape and out.dtype == x.dtype
    assert jnp.allclose(out, ref, atol=1e-5, rtol=1e-5)

    # SoftPlus2 is 0 at x = 0
    assert jnp.allclose(softplus2(jnp.zeros((8, 128), jnp.float32)), 0.0, atol=1e-6)

    # Ragged / non-lane-aligned small shape (exercises the pad + slice path).
    xr = jax.random.normal(jax.random.PRNGKey(2), (5, 7, 33), dtype=jnp.float32) * 8.0
    assert jnp.allclose(softplus2(xr), _ref_softplus2(xr), atol=1e-5, rtol=1e-5)

    # Large-input path with a ragged last block: 2304 rows, block_rows=2048 -> grid=2,
    # second block only partially filled (masked stores).
    xl = jax.random.normal(jax.random.PRNGKey(1), (2304, 1024), dtype=jnp.float32) * 10.0
    outl = softplus2(xl)
    jax.block_until_ready(outl)
    assert jnp.allclose(outl, _ref_softplus2(xl), atol=1e-5, rtol=1e-5)

    # bf16 input: byte-based block sizing path (block_rows doubles), loose tolerance.
    xb = (jax.random.normal(jax.random.PRNGKey(3), (4096, 768)) * 5.0).astype(jnp.bfloat16)
    outb = softplus2(xb)
    jax.block_until_ready(outb)
    assert outb.dtype == jnp.bfloat16
    assert jnp.allclose(outb.astype(jnp.float32), _ref_softplus2(xb).astype(jnp.float32),
                        atol=3e-2, rtol=3e-2)

    print("KERNEL_OK")
</pallas_src>

<mosaic_0001>
module attributes {stable_mosaic.version = 11 : i64} {
  func.func @_softplus2_kernel(%arg0: memref<16x128xf32, #tpu.memory_space<vmem>>, %arg1: memref<16x128xf32, #tpu.memory_space<vmem>>) attributes {dimension_semantics = [], scalar_prefetch = 0 : i64, scratch_operands = 0 : i64, tpu.core_type = #tpu.core_type<tc>} {
    %c0 = arith.constant 0 : index
    %c0_0 = arith.constant 0 : index
    %0 = vector.load %arg0[%c0, %c0_0] : memref<16x128xf32, #tpu.memory_space<vmem>>, vector<16x128xf32>
    %cst = arith.constant 0.000000e+00 : f32
    %1 = vector.broadcast %cst : f32 to vector<16x128xf32>
    %2 = arith.maximumf %0, %1 : vector<16x128xf32>
    %3 = math.absf %0 : vector<16x128xf32>
    %cst_1 = arith.constant 0.000000e+00 : f32
    %4 = vector.broadcast %cst_1 : f32 to vector<16x128xf32>
    %5 = arith.subf %4, %3 : vector<16x128xf32>
    %6 = math.exp %5 : vector<16x128xf32>
    %7 = math.log1p %6 : vector<16x128xf32>
    %8 = arith.addf %2, %7 : vector<16x128xf32>
    %cst_2 = arith.constant 2.000000e+01 : f32
    %9 = vector.broadcast %cst_2 : f32 to vector<16x128xf32>
    %10 = arith.cmpf ogt, %0, %9 : vector<16x128xf32>
    %11 = arith.select %10, %0, %8 : vector<16x128xi1>, vector<16x128xf32>
    %cst_3 = arith.constant 0.693147182 : f32
    %12 = vector.broadcast %cst_3 : f32 to vector<16x128xf32>
    %13 = arith.subf %11, %12 : vector<16x128xf32>
    %c0_4 = arith.constant 0 : index
    %c0_5 = arith.constant 0 : index
    %14 = vector.load %arg1[%c0_4, %c0_5] : memref<16x128xf32, #tpu.memory_space<vmem>>, vector<16x128xf32>
    tpu.vector_store %arg1[%c0_4, %c0_5], %13 {strides = array<i32>} : memref<16x128xf32, #tpu.memory_space<vmem>>, vector<16x128xf32>,
    return
  }
}

</mosaic_0001>

<llo_original>
// kernel: tpu_custom_call.1
$region0: #{tpu_custom_call.1}
  #allocation0 [shape = 'u32[]', space=smem, size = 0x4, offset = 0x4, fixed_abs, tag = 'smem constant byte address 0x4 - core index']
  #allocation1 [shape = 'u32[144,128]{1,0:T(1,128)}', space=vmem, size = 0x12000, scoped, tag = 'internal scratch']
  %s0 = inlined_call_operand.hbm [shape: f32[16,128], index: 0, kind: input, shape index: {}]
  %s1 = inlined_call_operand.hbm [shape: f32[16,128], index: 1, kind: output, shape index: {}]
  %s2 = sld [smem:[#allocation0]]
  $region18: #{tpu_custom_call.1} parent=0
    _
  %s4 = ssub.s32 1, %s2
  %s5 = scalar_select 0, %s4, %s2
  $region1: #{tpu_custom_call.1} parent=0
    #allocation2 [shape = 'u8[8192]{0}', space=vmem, size = 0x2000, scoped, tag = 'input window, operand 0, single buffered']
    #allocation3 [shape = 's32[1]{0}', space=sflag, size = 0x4, scoped, tag = 'scoped memory for tpu_custom_call.1']
    #allocation4 [shape = 's32[1]{0}', space=sflag, size = 0x4, scoped, tag = 'scoped memory for tpu_custom_call.1']
    #allocation5 [shape = 'u8[8192]{0}', space=vmem, size = 0x2000, scoped, tag = 'output window, operand 0, single buffered']
    %6 = vsyncpa [#allocation3], 0
    %7 = vsyncpa [#allocation4], 0
    // Predicated region
    $region2: #{tpu_custom_call.1} parent=1 // pred_check
      _
    $region3: #{tpu_custom_call.1} parent=1 // pred_check_branch
      %9 = sbr.rel (0) target = $region5
    $region4: #{tpu_custom_call.1} parent=1 // pred_region
      %s11 = ssub.s32 256, 256
      %12 = vsyncadd [#allocation3], %s11
      %s13 = sshll.u32 [#allocation2], 4
      %s14 = int_to_ptr.vmem [resolvable:$true] %s13
      %19 = dma.hbm_to_vmem [thread:$0]  %s0, 256, %s14, [#allocation3], 128, 128, 8
    $region5: #{tpu_custom_call.1} parent=1 // pred_fallthru
      _
    // Predicated region
    $region6: #{tpu_custom_call.1} parent=1 // pred_check
      _
    $region7: #{tpu_custom_call.1} parent=1 // pred_check_branch
      %21 = sbr.rel (0) target = $region9
    $region8: #{tpu_custom_call.1} parent=1 // pred_region
      %22 = dma.done [#allocation3], 256
    $region9: #{tpu_custom_call.1} parent=1 // pred_fallthru
      _
    %v23 = vld [vmem:[#allocation2] sm:$0xff]
    %v24 = vld [vmem:[#allocation2 + $0x8] sm:$0xff]
    %v25 = vmax.f32 %v23, 0.0
    %v26 = vmax.f32 %v24, 0.0
    %v27 = vand.u32 2147483647, %v23
    %v28 = vand.u32 2147483647, %v24
    %v29 = vsub.f32 0.0, %v27
    %v30 = vsub.f32 0.0, %v28
    %v31 = vmul.f32 %v29, 1.442695
    %v32 = vpow.pop %v31
    %v33 = vmul.f32 %v30, 1.442695
    %v34 = vpow.pop %v33
    %v35 = vadd.f32 %v32, 1.0
    %v36 = vlog2.pop %v35
    %v37 = vmul.f32 %v36, 0.6931472
    %v38 = vmul.f32 -0.5, %v32
    %v39 = vadd.f32 %v38, 1.0
    %v40 = vmul.f32 %v39, %v32
    %v41 = vand.u32 2147483647, %v32
    %vm42 = vcmp.lt.f32.partialorder %v41, 0.0004427343
    %v43 = vsel %vm42, %v40, %v37
    %v44 = vadd.f32 %v34, 1.0
    %v45 = vlog2.pop %v44
    %v46 = vmul.f32 %v45, 0.6931472
    %v47 = vmul.f32 -0.5, %v34
    %v48 = vadd.f32 %v47, 1.0
    %v49 = vmul.f32 %v48, %v34
    %v50 = vand.u32 2147483647, %v34
    %vm51 = vcmp.lt.f32.partialorder %v50, 0.0004427343
    %v52 = vsel %vm51, %v49, %v46
    %v53 = vadd.f32 %v25, %v43
    %v54 = vadd.f32 %v26, %v52
    %vm55 = vcmp.gt.f32.partialorder %v23, 20.0
    %vm56 = vcmp.gt.f32.partialorder %v24, 20.0
    %v57 = vsel %vm55, %v23, %v53
    %v58 = vsel %vm56, %v24, %v54
    %v59 = vsub.f32 %v57, 0.6931472
    %v60 = vsub.f32 %v58, 0.6931472
    %61 = vst [vmem:[#allocation5] sm:$0xff] %v59
    %62 = vst [vmem:[#allocation5 + $0x8] sm:$0xff] %v60
    // Predicated region
    $region10: #{tpu_custom_call.1} parent=1 // pred_check
      _
    $region11: #{tpu_custom_call.1} parent=1 // pred_check_branch
      %64 = sbr.rel (0) target = $region13
    $region12: #{tpu_custom_call.1} parent=1 // pred_region
      %s66 = ssub.s32 256, 256
      %67 = vsyncadd [#allocation4], %s66
      %s68 = sshll.u32 [#allocation5], 4
      %s69 = int_to_ptr.vmem [resolvable:$true] %s68
      %74 = dma.vmem_to_hbm [thread:$0]  %s69, 256, %s1, [#allocation4], 128, 128, 8
    $region13: #{tpu_custom_call.1} parent=1 // pred_fallthru
      _
    // Predicated region
    $region14: #{tpu_custom_call.1} parent=1 // pred_check
      _
    $region15: #{tpu_custom_call.1} parent=1 // pred_check_branch
      %76 = sbr.rel (0) target = $region17
    $region16: #{tpu_custom_call.1} parent=1 // pred_region
      %77 = dma.done [#allocation4], 256
    $region17: #{tpu_custom_call.1} parent=1 // pred_fallthru
      _
    %78 = vsyncpa [#allocation3], 1
    %79 = vsyncpa [#allocation4], 1

</llo_original>
